<compile_context>
chip_gen: v7x
topology: tpu7x:2x2x1
jax: 0.10.0
libtpu: 0.0.40
codegen_flags: <defaults>
</compile_context>

<pallas_src>
import functools

import jax
import jax.numpy as jnp
import numpy as np
from jax.experimental import pallas as pl
from jax.experimental.pallas import tpu as pltpu

EPS = 1e-5
_COL_OFF = 8                      # interior column offset (sublane-aligned stores)
COMPUTE_DTYPE = jnp.float32       # set to jnp.bfloat16 for production throughput


def _cout_tile(cout):
    if cout <= 256:
        return cout
    for t in (256, 128):
        if cout % t == 0:
            return t
    return cout


# ------------------------------ in-kernel helpers --------------------------- #

def _make_sampler(xp_sc, Ho, Wo, stride):
    """sample(dy, dx) -> (Ho*Wo, Cin) window of the padded activation at padded
    coords (dy + stride*i, (dx + _COL_OFF - 1) + stride*j)."""
    Hp, Wp, Cin = xp_sc.shape

    if stride == 1:
        def sample(dy, dx):
            c = dx + _COL_OFF - 1
            return xp_sc[dy:dy + Ho, c:c + Wo, :].reshape(Ho * Wo, Cin)
        return sample

    # stride > 1 (only the first, downsampling conv of the block): split the padded
    # activation once into stride x stride phase planes (lane dim Cin preserved) so
    # every tap is a unit-stride slice and no post-hoc output subsampling is needed.
    xp = xp_sc[...]
    Hq, Wq = Hp // stride, Wp // stride
    xq = xp[:, :Wq * stride, :].reshape(Hp, Wq, stride, Cin)
    planes = {}
    for px in range(stride):
        colp = xq[:, :, px:px + 1, :].reshape(Hp, Wq, Cin)
        cq = colp[:Hq * stride].reshape(Hq, stride, Wq, Cin)
        for py in range(stride):
            planes[(py, px)] = cq[:, py:py + 1].reshape(Hq, Wq, Cin)

    def sample(dy, dx):
        c = dx + _COL_OFF - 1
        p = planes[(dy % stride, c % stride)]
        return p[dy // stride:dy // stride + Ho,
                 c // stride:c // stride + Wo, :].reshape(Ho * Wo, Cin)
    return sample


def _build_slab(x_ref, scale_ref, shift_ref, xp_sc, slab_sc, stride):
    """BN+ReLU prologue -> zero-halo padded scratch -> (Ho*Wo, 9*Cin) im2col slab."""
    _, H, W, Cin = x_ref.shape
    Hp, Wp, _ = xp_sc.shape
    dt = xp_sc.dtype
    # Zero only the halo strips the 3x3 taps read (row 0, row H+1, the one column on
    # each side of the interior); the interior is fully overwritten just below.
    xp_sc[0:1, :, :] = jnp.zeros((1, Wp, Cin), dt)
    xp_sc[H + 1:H + 2, :, :] = jnp.zeros((1, Wp, Cin), dt)
    xp_sc[:, _COL_OFF - 1:_COL_OFF, :] = jnp.zeros((Hp, 1, Cin), dt)
    xp_sc[:, _COL_OFF + W:_COL_OFF + W + 1, :] = jnp.zeros((Hp, 1, Cin), dt)

    x = x_ref[0].astype(jnp.float32).reshape(H * W, Cin)
    a = jnp.maximum(x * scale_ref[...] + shift_ref[...], 0.0)
    xp_sc[1:H + 1, _COL_OFF:_COL_OFF + W, :] = a.reshape(H, W, Cin).astype(dt)

    Ho = (H - 1) // stride + 1
    Wo = (W - 1) // stride + 1
    sample = _make_sampler(xp_sc, Ho, Wo, stride)
    for t in range(9):                       # im2col: K = 9*Cin for a single matmul
        slab_sc[:, t * Cin:(t + 1) * Cin] = sample(t // 3, t % 3)


def _out_stats(val, n_pix, sum_ref, m2_ref):
    """Per-image, per-channel sum and centered M2 of this kernel's output (feeds the
    next BatchNorm without re-reading the tensor from HBM)."""
    ct = val.shape[-1]
    s = jnp.sum(val, axis=0, keepdims=True)
    mu = s * (1.0 / n_pix)
    d = val - mu
    sum_ref[...] = s.reshape(1, 1, ct)
    m2_ref[...] = jnp.sum(d * d, axis=0, keepdims=True).reshape(1, 1, ct)


# ------------------------------ Pallas kernels ------------------------------ #

def _stats_kernel(x_ref, sum_ref, m2_ref):
    # Per-image BN partials for the module input (the only tensor not produced by a
    # conv kernel in this module).  Grid is parallel over N.
    _, H, W, C = x_ref.shape
    x = x_ref[0].astype(jnp.float32).reshape(H * W, C)
    _out_stats(x, H * W, sum_ref, m2_ref)


def _conv_bnrelu_kernel(x_ref, scale_ref, shift_ref, w_ref,
                        o_ref, sum_ref, m2_ref, xp_sc, slab_sc, *, stride):
    # o = conv3x3(relu(bn(x)), stride) for one Cout tile; epilogue emits output stats.
    _, Ho, Wo, Ct = o_ref.shape

    @pl.when(pl.program_id(1) == 0)
    def _():
        _build_slab(x_ref, scale_ref, shift_ref, xp_sc, slab_sc, stride)

    acc = jnp.dot(slab_sc[...], w_ref[...], preferred_element_type=jnp.float32)
    o_ref[...] = acc.reshape(1, Ho, Wo, Ct).astype(o_ref.dtype)
    _out_stats(acc, Ho * Wo, sum_ref, m2_ref)


def _conv_bnrelu_shortcut_kernel(x_ref, scale_ref, shift_ref, w_ref, wsc_ref,
                                 o_ref, sc_ref, sum_ref, m2_ref, xp_sc, slab_sc,
                                 *, stride):
    # Downsampling block: conv1 and the strided 1x1 shortcut share the same normalized
    # activation (the slab's center tap IS the strided relu(bn1(x)) sampling).
    _, Ho, Wo, Ct = o_ref.shape
    Cin = x_ref.shape[-1]

    @pl.when(pl.program_id(1) == 0)
    def _():
        _build_slab(x_ref, scale_ref, shift_ref, xp_sc, slab_sc, stride)

    acc = jnp.dot(slab_sc[...], w_ref[...], preferred_element_type=jnp.float32)
    o_ref[...] = acc.reshape(1, Ho, Wo, Ct).astype(o_ref.dtype)
    _out_stats(acc, Ho * Wo, sum_ref, m2_ref)

    a_center = slab_sc[:, 4 * Cin:5 * Cin]           # center tap == (s*i, s*j) samples
    sc = jnp.dot(a_center, wsc_ref[...], preferred_element_type=jnp.float32)
    sc_ref[...] = sc.reshape(1, Ho, Wo, Ct).astype(sc_ref.dtype)


def _conv_bnrelu_add_kernel(x_ref, scale_ref, shift_ref, w_ref, res_ref,
                            o_ref, sum_ref, m2_ref, xp_sc, slab_sc):
    # Second conv of the block: conv3x3(relu(bn(h))) + residual, fused; epilogue emits
    # the block-output stats that feed the next block's bn1.
    _, Ho, Wo, Ct = o_ref.shape

    @pl.when(pl.program_id(1) == 0)
    def _():
        _build_slab(x_ref, scale_ref, shift_ref, xp_sc, slab_sc, 1)

    acc = jnp.dot(slab_sc[...], w_ref[...], preferred_element_type=jnp.float32)
    out = acc + res_ref[0].astype(jnp.float32).reshape(Ho * Wo, Ct)
    o_ref[...] = out.reshape(1, Ho, Wo, Ct).astype(o_ref.dtype)
    _out_stats(out, Ho * Wo, sum_ref, m2_ref)


# ------------------------------ kernel wrappers ------------------------------ #

_CONV_PARAMS = dict(vmem_limit_bytes=32 * 1024 * 1024)


def input_stats(x):
    N, H, W, C = x.shape
    return pl.pallas_call(
        _stats_kernel,
        out_shape=(jax.ShapeDtypeStruct((N, 1, C), jnp.float32),
                   jax.ShapeDtypeStruct((N, 1, C), jnp.float32)),
        grid=(N,),
        in_specs=[pl.BlockSpec((1, H, W, C), lambda n: (n, 0, 0, 0))],
        out_specs=(pl.BlockSpec((1, 1, C), lambda n: (n, 0, 0)),
                   pl.BlockSpec((1, 1, C), lambda n: (n, 0, 0))),
        compiler_params=pltpu.CompilerParams(dimension_semantics=("parallel",)),
    )(x)


def _conv_common(x, w, stride):
    N, H, W, Cin = x.shape
    Cout = w.shape[-1]
    if stride > 1:
        assert H % stride == 0 and W % stride == 0
    Ho, Wo = (H - 1) // stride + 1, (W - 1) // stride + 1
    tc = _cout_tile(Cout)
    assert Cout % tc == 0
    w2 = w.reshape(9 * Cin, Cout).astype(COMPUTE_DTYPE)
    scratches = [pltpu.VMEM((H + 2, W + 2 * _COL_OFF, Cin), COMPUTE_DTYPE),
                 pltpu.VMEM((Ho * Wo, 9 * Cin), COMPUTE_DTYPE)]
    return N, H, W, Cin, Cout, Ho, Wo, tc, w2, scratches


def conv3x3_bnrelu(x, scale, shift, w, stride):
    N, H, W, Cin, Cout, Ho, Wo, tc, w2, scratches = _conv_common(x, w, stride)
    kernel = functools.partial(_conv_bnrelu_kernel, stride=stride)
    return pl.pallas_call(
        kernel,
        out_shape=(jax.ShapeDtypeStruct((N, Ho, Wo, Cout), x.dtype),
                   jax.ShapeDtypeStruct((N, 1, Cout), jnp.float32),
                   jax.ShapeDtypeStruct((N, 1, Cout), jnp.float32)),
        grid=(N, Cout // tc),
        in_specs=[
            pl.BlockSpec((1, H, W, Cin), lambda n, j: (n, 0, 0, 0)),
            pl.BlockSpec((1, Cin), lambda n, j: (0, 0)),
            pl.BlockSpec((1, Cin), lambda n, j: (0, 0)),
            pl.BlockSpec((9 * Cin, tc), lambda n, j: (0, j)),
        ],
        out_specs=(pl.BlockSpec((1, Ho, Wo, tc), lambda n, j: (n, 0, 0, j)),
                   pl.BlockSpec((1, 1, tc), lambda n, j: (n, 0, j)),
                   pl.BlockSpec((1, 1, tc), lambda n, j: (n, 0, j))),
        scratch_shapes=scratches,
        compiler_params=pltpu.CompilerParams(
            dimension_semantics=("parallel", "arbitrary"), **_CONV_PARAMS),
    )(x, scale, shift, w2)


def conv3x3_bnrelu_shortcut(x, scale, shift, w, wsc, stride):
    N, H, W, Cin, Cout, Ho, Wo, tc, w2, scratches = _conv_common(x, w, stride)
    assert wsc.shape == (Cin, Cout)
    wsc2 = wsc.astype(COMPUTE_DTYPE)
    kernel = functools.partial(_conv_bnrelu_shortcut_kernel, stride=stride)
    return pl.pallas_call(
        kernel,
        out_shape=(jax.ShapeDtypeStruct((N, Ho, Wo, Cout), x.dtype),
                   jax.ShapeDtypeStruct((N, Ho, Wo, Cout), x.dtype),
                   jax.ShapeDtypeStruct((N, 1, Cout), jnp.float32),
                   jax.ShapeDtypeStruct((N, 1, Cout), jnp.float32)),
        grid=(N, Cout // tc),
        in_specs=[
            pl.BlockSpec((1, H, W, Cin), lambda n, j: (n, 0, 0, 0)),
            pl.BlockSpec((1, Cin), lambda n, j: (0, 0)),
            pl.BlockSpec((1, Cin), lambda n, j: (0, 0)),
            pl.BlockSpec((9 * Cin, tc), lambda n, j: (0, j)),
            pl.BlockSpec((Cin, tc), lambda n, j: (0, j)),
        ],
        out_specs=(pl.BlockSpec((1, Ho, Wo, tc), lambda n, j: (n, 0, 0, j)),
                   pl.BlockSpec((1, Ho, Wo, tc), lambda n, j: (n, 0, 0, j)),
                   pl.BlockSpec((1, 1, tc), lambda n, j: (n, 0, j)),
                   pl.BlockSpec((1, 1, tc), lambda n, j: (n, 0, j))),
        scratch_shapes=scratches,
        compiler_params=pltpu.CompilerParams(
            dimension_semantics=("parallel", "arbitrary"), **_CONV_PARAMS),
    )(x, scale, shift, w2, wsc2)


def conv3x3_bnrelu_add(x, scale, shift, w, residual):
    N, H, W, Cin, Cout, Ho, Wo, tc, w2, scratches = _conv_common(x, w, 1)
    return pl.pallas_call(
        _conv_bnrelu_add_kernel,
        out_shape=(jax.ShapeDtypeStruct((N, Ho, Wo, Cout), x.dtype),
                   jax.ShapeDtypeStruct((N, 1, Cout), jnp.float32),
                   jax.ShapeDtypeStruct((N, 1, Cout), jnp.float32)),
        grid=(N, Cout // tc),
        in_specs=[
            pl.BlockSpec((1, H, W, Cin), lambda n, j: (n, 0, 0, 0)),
            pl.BlockSpec((1, Cin), lambda n, j: (0, 0)),
            pl.BlockSpec((1, Cin), lambda n, j: (0, 0)),
            pl.BlockSpec((9 * Cin, tc), lambda n, j: (0, j)),
            pl.BlockSpec((1, H, W, tc), lambda n, j: (n, 0, 0, j)),
        ],
        out_specs=(pl.BlockSpec((1, Ho, Wo, tc), lambda n, j: (n, 0, 0, j)),
                   pl.BlockSpec((1, 1, tc), lambda n, j: (n, 0, j)),
                   pl.BlockSpec((1, 1, tc), lambda n, j: (n, 0, j))),
        scratch_shapes=scratches,
        compiler_params=pltpu.CompilerParams(
            dimension_semantics=("parallel", "arbitrary"), **_CONV_PARAMS),
    )(x, scale, shift, w2, residual)


# ------------------------------ module forward ------------------------------ #

def _finish_bn(sums, m2s, per_count, gamma, beta):
    # Chan's parallel-variance combine of per-image (sum, centered M2) partials.
    sums = sums.reshape(sums.shape[0], -1).astype(jnp.float32)
    m2s = m2s.reshape(m2s.shape[0], -1).astype(jnp.float32)
    count = float(per_count) * sums.shape[0]
    mean = jnp.sum(sums, axis=0) / count
    mean_n = sums / float(per_count)
    m2 = jnp.sum(m2s, axis=0) + float(per_count) * jnp.sum(
        (mean_n - mean[None, :]) ** 2, axis=0)
    var = m2 / count                                   # biased variance (training BN)
    inv = jax.lax.rsqrt(var + EPS)
    scale = gamma.astype(jnp.float32) * inv
    shift = beta.astype(jnp.float32) - mean * scale
    return scale.reshape(1, -1), shift.reshape(1, -1)


def basic_block(x, p, stride, in_stats=None):
    # WideResNet BasicBlock, dropRate = 0.0.
    N, H, W, Cin = x.shape
    Cout = p["conv1_w"].shape[-1]
    equal_in_out = Cin == Cout

    if in_stats is None:
        in_stats = input_stats(x)
    scale1, shift1 = _finish_bn(*in_stats, per_count=H * W,
                                gamma=p["bn1_g"], beta=p["bn1_b"])

    if equal_in_out:
        h, hsum, hm2 = conv3x3_bnrelu(x, scale1, shift1, p["conv1_w"], stride)
        shortcut = x
    else:
        h, shortcut, hsum, hm2 = conv3x3_bnrelu_shortcut(
            x, scale1, shift1, p["conv1_w"], p["convsc_w"], stride)

    Ho, Wo = h.shape[1], h.shape[2]
    scale2, shift2 = _finish_bn(hsum, hm2, per_count=Ho * Wo,
                                gamma=p["bn2_g"], beta=p["bn2_b"])
    # TODO(synk): F.dropout for dropRate > 0 not implemented (dropRate == 0.0 here).
    out, osum, om2 = conv3x3_bnrelu_add(h, scale2, shift2, p["conv2_w"], shortcut)
    return out, (osum, om2)


def network_block(x_nchw, params, stride):
    x = jnp.transpose(x_nchw, (0, 2, 3, 1))           # NCHW -> NHWC
    stats = None                                       # chained BN stats (epilogue-fused)
    for i, p in enumerate(params):
        x, stats = basic_block(x, p, stride if i == 0 else 1, in_stats=stats)
    return jnp.transpose(x, (0, 3, 1, 2))             # NHWC -> NCHW


def init_params(key, nb_layers, in_planes, out_planes):
    params = []
    for i in range(nb_layers):
        cin = in_planes if i == 0 else out_planes
        key, k1, k2, k3, k4, k5, k6, k7 = jax.random.split(key, 8)
        p = {
            "bn1_g": 1.0 + 0.1 * jax.random.normal(k1, (cin,), jnp.float32),
            "bn1_b": 0.1 * jax.random.normal(k2, (cin,), jnp.float32),
            "conv1_w": jax.random.normal(k3, (3, 3, cin, out_planes), jnp.float32)
                       * np.sqrt(2.0 / (9 * cin)),
            "bn2_g": 1.0 + 0.1 * jax.random.normal(k4, (out_planes,), jnp.float32),
            "bn2_b": 0.1 * jax.random.normal(k5, (out_planes,), jnp.float32),
            "conv2_w": jax.random.normal(k6, (3, 3, out_planes, out_planes), jnp.float32)
                       * np.sqrt(2.0 / (9 * out_planes)),
        }
        if cin != out_planes:
            p["convsc_w"] = (jax.random.normal(k7, (cin, out_planes), jnp.float32)
                             * np.sqrt(2.0 / cin))
        params.append(p)
    return params


# ------------------------------ pure-JAX reference --------------------------- #

def _ref_bn_relu(x, g, b):
    mean = jnp.mean(x, axis=(0, 1, 2), keepdims=True)
    var = jnp.mean((x - mean) ** 2, axis=(0, 1, 2), keepdims=True)
    return jnp.maximum((x - mean) / jnp.sqrt(var + EPS) * g + b, 0.0)


def _ref_conv(x, w, stride, pad):
    return jax.lax.conv_general_dilated(
        x, w, (stride, stride), [(pad, pad), (pad, pad)],
        dimension_numbers=("NHWC", "HWIO", "NHWC"),
        precision=jax.lax.Precision.HIGHEST)


def _ref_basic_block(x, p, stride):
    equal = x.shape[-1] == p["conv1_w"].shape[-1]
    a = _ref_bn_relu(x, p["bn1_g"], p["bn1_b"])
    h = _ref_conv(a, p["conv1_w"], stride, 1)
    h = _ref_bn_relu(h, p["bn2_g"], p["bn2_b"])
    h = _ref_conv(h, p["conv2_w"], 1, 1)
    sc = x if equal else _ref_conv(a, p["convsc_w"].reshape(1, 1, *p["convsc_w"].shape),
                                   stride, 0)
    return sc + h


def _ref_network_block(x_nchw, params, stride):
    x = jnp.transpose(x_nchw, (0, 2, 3, 1))
    for i, p in enumerate(params):
        x = _ref_basic_block(x, p, stride if i == 0 else 1)
    return jnp.transpose(x, (0, 3, 1, 2))


# ----------------------------------- main ------------------------------------ #

if __name__ == "__main__":
    nb_layers, in_planes, out_planes, stride = 2, 4, 8, 2
    key = jax.random.PRNGKey(0)
    kx, kp = jax.random.split(key)
    x = jax.random.normal(kx, (2, in_planes, 16, 16), jnp.float32)   # NCHW like PyTorch
    params = init_params(kp, nb_layers, in_planes, out_planes)

    out = jax.block_until_ready(network_block(x, params, stride))
    ref = jax.block_until_ready(_ref_network_block(x, params, stride))

    assert out.shape == (2, out_planes, 8, 8), out.shape
    np.testing.assert_allclose(np.asarray(out), np.asarray(ref), atol=1e-3, rtol=1e-3)
    print("KERNEL_OK")
</pallas_src>

<mosaic_0001>
module attributes {stable_mosaic.version = 11 : i64} {
  func.func @_stats_kernel(%arg0: i32, %arg1: memref<1x16x16x4xf32, #tpu.memory_space<vmem>>, %arg2: memref<1x1x4xf32, #tpu.memory_space<vmem>>, %arg3: memref<1x1x4xf32, #tpu.memory_space<vmem>>) attributes {dimension_semantics = [#tpu.dimension_semantics<parallel>], iteration_bounds = array<i64: 2>, scalar_prefetch = 0 : i64, scratch_operands = 0 : i64, tpu.core_type = #tpu.core_type<tc>, window_params = [{transform_indices = @transform_0, window_bounds = array<i64: 1, 16, 16, 4>}, {transform_indices = @transform_1, window_bounds = array<i64: 1, 1, 4>}, {transform_indices = @transform_2, window_bounds = array<i64: 1, 1, 4>}]} {
    %c0 = arith.constant 0 : index
    %c0_0 = arith.constant 0 : index
    %c0_1 = arith.constant 0 : index
    %c0_2 = arith.constant 0 : index
    %0 = vector.load %arg1[%c0, %c0_0, %c0_1, %c0_2] : memref<1x16x16x4xf32, #tpu.memory_space<vmem>>, vector<1x16x16x4xf32>
    %1 = vector.shape_cast %0 : vector<1x16x16x4xf32> to vector<16x16x4xf32>
    %2 = vector.shape_cast %1 : vector<16x16x4xf32> to vector<256x4xf32>
    %cst = arith.constant dense<0.000000e+00> : vector<4xf32>
    %3 = vector.multi_reduction <add>, %2, %cst [0] : vector<256x4xf32> to vector<4xf32>
    %4 = vector.shape_cast %3 : vector<4xf32> to vector<1x4xf32>
    %cst_3 = arith.constant 3.906250e-03 : f32
    %5 = vector.broadcast %cst_3 : f32 to vector<1x4xf32>
    %6 = arith.mulf %4, %5 : vector<1x4xf32>
    %7 = vector.broadcast %6 : vector<1x4xf32> to vector<256x4xf32>
    %8 = arith.subf %2, %7 : vector<256x4xf32>
    %9 = vector.shape_cast %4 : vector<1x4xf32> to vector<1x1x4xf32>
    %c0_4 = arith.constant 0 : index
    %c0_5 = arith.constant 0 : index
    %c0_6 = arith.constant 0 : index
    %10 = vector.load %arg2[%c0_4, %c0_5, %c0_6] : memref<1x1x4xf32, #tpu.memory_space<vmem>>, vector<1x1x4xf32>
    tpu.vector_store %arg2[%c0_4, %c0_5, %c0_6], %9 {strides = array<i32>} : memref<1x1x4xf32, #tpu.memory_space<vmem>>, vector<1x1x4xf32>,
    %11 = arith.mulf %8, %8 : vector<256x4xf32>
    %cst_7 = arith.constant dense<0.000000e+00> : vector<4xf32>
    %12 = vector.multi_reduction <add>, %11, %cst_7 [0] : vector<256x4xf32> to vector<4xf32>
    %13 = vector.shape_cast %12 : vector<4xf32> to vector<1x4xf32>
    %14 = vector.shape_cast %13 : vector<1x4xf32> to vector<1x1x4xf32>
    %c0_8 = arith.constant 0 : index
    %c0_9 = arith.constant 0 : index
    %c0_10 = arith.constant 0 : index
    %15 = vector.load %arg3[%c0_8, %c0_9, %c0_10] : memref<1x1x4xf32, #tpu.memory_space<vmem>>, vector<1x1x4xf32>
    tpu.vector_store %arg3[%c0_8, %c0_9, %c0_10], %14 {strides = array<i32>} : memref<1x1x4xf32, #tpu.memory_space<vmem>>, vector<1x1x4xf32>,
    return
  }
  func.func @transform_0(%arg0: i32) -> (i32, i32, i32, i32) {
    %c0_i32 = arith.constant 0 : i32
    %c0_i32_0 = arith.constant 0 : i32
    %c0_i32_1 = arith.constant 0 : i32
    %c0_i32_2 = arith.constant 0 : i32
    return %arg0, %c0_i32, %c0_i32_0, %c0_i32_1 : i32, i32, i32, i32
  }
  func.func @transform_1(%arg0: i32) -> (i32, i32, i32) {
    %c0_i32 = arith.constant 0 : i32
    %c0_i32_0 = arith.constant 0 : i32
    %c0_i32_1 = arith.constant 0 : i32
    return %arg0, %c0_i32, %c0_i32_0 : i32, i32, i32
  }
  func.func @transform_2(%arg0: i32) -> (i32, i32, i32) {
    %c0_i32 = arith.constant 0 : i32
    %c0_i32_0 = arith.constant 0 : i32
    %c0_i32_1 = arith.constant 0 : i32
    return %arg0, %c0_i32, %c0_i32_0 : i32, i32, i32
  }
}

</mosaic_0001>

<llo_original>
// kernel: tpu_custom_call.1
$region0: #{tpu_custom_call.1}
  #allocation0 [shape = 'u32[]', space=smem, size = 0x4, offset = 0x4, fixed_abs, tag = 'smem constant byte address 0x4 - core index']
  #allocation1 [shape = 'u32[144,128]{1,0:T(1,128)}', space=vmem, size = 0x12000, scoped, tag = 'internal scratch']
  %s0 = inlined_call_operand.vmem [shape: f32[2,16,16,4], index: 0, kind: input, shape index: {}]
  %s1 = inlined_call_operand.hbm [shape: f32[2,1,4], index: 1, kind: output, shape index: {0}]
  %s2 = inlined_call_operand.hbm [shape: f32[2,1,4], index: 2, kind: output, shape index: {1}]
  %3 = xla_tuple %s1, %s2
  %s4 = sld [smem:[#allocation0]]
  $region45: #{tpu_custom_call.1} parent=0
    _
  %s6 = ssub.s32 1, %s4
  %s7 = scalar_select 0, %s6, %s4
  $region1: #{tpu_custom_call.1} parent=0
    #allocation2 [shape = 'u8[1024]{0}', space=vmem, size = 0x400, scoped, tag = 'output window, operand 0']
    #allocation3 [shape = 's32[2]{0}', space=sflag, size = 0x8, scoped, tag = 'scoped memory for tpu_custom_call.1']
    #allocation4 [shape = 'u8[1024]{0}', space=vmem, size = 0x400, scoped, tag = 'output window, operand 1']
    #allocation5 [shape = 's32[2]{0}', space=sflag, size = 0x8, scoped, tag = 'scoped memory for tpu_custom_call.1']
    %8 = vsyncpa [#allocation3], 0
    %s9 = scalar_lea.sflag [#allocation3], 1
    %10 = vsyncpa %s9, 0
    %11 = vsyncpa [#allocation5], 0
    %s12 = scalar_lea.sflag [#allocation5], 1
    %13 = vsyncpa %s12, 0
    loop: start=0, step=1, limit=4
    $region2: #{tpu_custom_call.1} parent=1 // loop_pre_header
      _
    $region3: #{tpu_custom_call.1} parent=1 // loop_header
      %s15 = sphi 0, %s19
      %p16 = scmp.ge.s32.totalorder %s15, 4
      %s25 = sphi 0, %s27
      %s28 = sphi 0, %s25
      %s29 = sphi 0, %s28
      %s45 = sphi 0, %s29
      %s51 = sphi 0, %s53
      %s54 = sphi 0, %s51
      %s55 = sphi 0, %s54
      %s71 = sphi 0, %s55
      %s77 = sphi 0, %s79
      %s80 = sphi 0, %s77
      %s81 = sphi 0, %s80
      %s97 = sphi 0, %s81
    $region4: #{tpu_custom_call.1} parent=1 // loop_header_branch
      %18 = sbr.rel (%p16) target = $region8
    $region5: #{tpu_custom_call.1} parent=1 // loop_body
      %s20 = ssub.s32 %s15, 1
      %s21 = ssub.s32 %s15, 2
      %s22 = sadd.s32 %s15, 1
      %s23 = ssub.s32 %s15, %s22
      %p24 = scmp.eq.s32.totalorder %s23, 0
      %s26 = sadd.s32 %s25, 1
      %s27 = scalar_select %p24, %s25, %s26
      %p30 = pneg %p24
      %p31 = scmp.eq.s32.totalorder %s15, 1
      %p32 = por %p30, %p31
      %p33 = scmp.ne.s32.totalorder %s25, %s28
      %p34 = scmp.eq.s32.totalorder %s15, 0
      %p35 = por %p33, %p34
      %p36 = scmp.ne.s32.totalorder %s25, %s28
      %p37 = scmp.eq.s32.totalorder %s20, 1
      %p38 = por %p36, %p37
      %p39 = scmp.ne.s32.totalorder %s28, %s29
      %p40 = scmp.eq.s32.totalorder %s20, 0
      %p41 = por %p39, %p40
      %p42 = scmp.ne.s32.totalorder %s28, %s29
      %p43 = scmp.eq.s32.totalorder %s21, 1
      %p44 = por %p42, %p43
      %p46 = scmp.ne.s32.totalorder %s29, %s45
      %p47 = scmp.eq.s32.totalorder %s21, 0
      %p48 = por %p46, %p47
      %s49 = ssub.s32 %s15, %s22
      %p50 = scmp.eq.s32.totalorder %s49, 0
      %s52 = sadd.s32 %s51, 1
      %s53 = scalar_select %p50, %s51, %s52
      %p56 = pneg %p50
      %p57 = scmp.eq.s32.totalorder %s15, 1
      %p58 = por %p56, %p57
      %p59 = scmp.ne.s32.totalorder %s51, %s54
      %p60 = scmp.eq.s32.totalorder %s15, 0
      %p61 = por %p59, %p60
      %p62 = scmp.ne.s32.totalorder %s51, %s54
      %p63 = scmp.eq.s32.totalorder %s20, 1
      %p64 = por %p62, %p63
      %p65 = scmp.ne.s32.totalorder %s54, %s55
      %p66 = scmp.eq.s32.totalorder %s20, 0
      %p67 = por %p65, %p66
      %p68 = scmp.ne.s32.totalorder %s54, %s55
      %p69 = scmp.eq.s32.totalorder %s21, 1
      %p70 = por %p68, %p69
      %p72 = scmp.ne.s32.totalorder %s55, %s71
      %p73 = scmp.eq.s32.totalorder %s21, 0
      %p74 = por %p72, %p73
      %s75 = ssub.s32 %s15, %s22
      %p76 = scmp.eq.s32.totalorder %s75, 0
      %s78 = sadd.s32 %s77, 1
      %s79 = scalar_select %p76, %s77, %s78
      %p82 = pneg %p76
      %p83 = scmp.eq.s32.totalorder %s15, 1
      %p84 = por %p82, %p83
      %p85 = scmp.ne.s32.totalorder %s77, %s80
      %p86 = scmp.eq.s32.totalorder %s15, 0
      %p87 = por %p85, %p86
      %p88 = scmp.ne.s32.totalorder %s77, %s80
      %p89 = scmp.eq.s32.totalorder %s20, 1
      %p90 = por %p88, %p89
      %p91 = scmp.ne.s32.totalorder %s80, %s81
      %p92 = scmp.eq.s32.totalorder %s20, 0
      %p93 = por %p91, %p92
      %p94 = scmp.ne.s32.totalorder %s80, %s81
      %p95 = scmp.eq.s32.totalorder %s21, 1
      %p96 = por %p94, %p95
      %p98 = scmp.ne.s32.totalorder %s81, %s97
      %p99 = scmp.eq.s32.totalorder %s21, 0
      %p100 = por %p98, %p99
      %p101 = scmp.le.s32.totalorder 1, %s15
      %p102 = scmp.lt.s32.totalorder %s15, 3
      %p103 = pnand %p101, %p102
      %p104 = pneg %p103
      // Predicated region
      $region9: #{tpu_custom_call.1} parent=5 // pred_check
        _
      $region10: #{tpu_custom_call.1} parent=5 // pred_check_branch
        %106 = sbr.rel (%p103) target = $region12
      $region11: #{tpu_custom_call.1} parent=5 // pred_region
        %s107 = ssub.s32 %s15, 1
      $region12: #{tpu_custom_call.1} parent=5 // pred_fallthru
        _
      %p108 = scmp.lt.s32.totalorder %s15, 2
      // Predicated region
      $region13: #{tpu_custom_call.1} parent=5 // pred_check
        %p109 = pneg %p108
      $region14: #{tpu_custom_call.1} parent=5 // pred_check_branch
        %111 = sbr.rel (%p109) target = $region16
      $region15: #{tpu_custom_call.1} parent=5 // pred_region
        // Predicated region
        $region17: #{tpu_custom_call.1} parent=15 // pred_check
          %p112 = pneg %p35
        $region18: #{tpu_custom_call.1} parent=15 // pred_check_branch
          %114 = sbr.rel (%p112) target = $region20
        $region19: #{tpu_custom_call.1} parent=15 // pred_region
          %p115 = scmp.lt.s32.totalorder %s15, 1
          %s116 = scalar_select %p115, %s15, 1
          %s117 = smul.addr %s116, 32
          %s118 = smul.addr %s117, 8
          %s119 = scalar_lea.vmem %s0, %s118
        $region20: #{tpu_custom_call.1} parent=15 // pred_fallthru
          _
      $region16: #{tpu_custom_call.1} parent=5 // pred_fallthru
        _
      %p120 = scmp.le.s32.totalorder 1, %s15
      %p121 = scmp.lt.s32.totalorder %s15, 3
      %p122 = pnand %p120, %p121
      %p123 = pneg %p122
      // Predicated region
      $region21: #{tpu_custom_call.1} parent=5 // pred_check
        _
      $region22: #{tpu_custom_call.1} parent=5 // pred_check_branch
        %125 = sbr.rel (%p122) target = $region24
      $region23: #{tpu_custom_call.1} parent=5 // pred_region
        %s126 = ssub.s32 %s15, 1
        %p127 = scmp.lt.s32.totalorder %s20, 1
        %s128 = scalar_select %p127, %s20, 1
        %s129 = smul.addr %s128, 32
        %s130 = smul.addr %s129, 8
        %s131 = scalar_lea.vmem %s0, %s130
        %p132 = pneg %p41
        %p133 = pneg %p38
        %p134 = pneg %p67
        %p135 = pneg %p64
        %s136 = sand.u32 %s54, 1
        %s137 = scalar_lea.sflag [#allocation3], %s136
        %s138 = sand.u32 %s54, 1
        %s139 = scalar_lea.vmem [#allocation2], %s138
        %p140 = pneg %p93
        %p141 = pneg %p90
        %s142 = sand.u32 %s80, 1
        %s143 = scalar_lea.sflag [#allocation5], %s142
        %s144 = sand.u32 %s80, 1
        %s145 = scalar_lea.vmem [#allocation4], %s144
        %p146 = scmp.lt.s32.totalorder %s20, 1
        %s147 = scalar_select %p146, %s20, 1
        %s148 = smul.addr %s147, 32
        %s149 = smul.addr %s148, 8
        %s150 = scalar_lea.vmem %s0, %s149
        %v151 = vld [vmem:[%s150] sm:$0xff]
        %v152 = vld [vmem:[%s150 + $0x8] sm:$0xff]
        %v153 = vld [vmem:[%s150 + $0x10] sm:$0xff]
        %v154 = vld [vmem:[%s150 + $0x18] sm:$0xff]
        %v155 = vld [vmem:[%s150 + $0x20] sm:$0xff]
        %v156 = vld [vmem:[%s150 + $0x28] sm:$0xff]
        %v157 = vld [vmem:[%s150 + $0x30] sm:$0xff]
        %v158 = vld [vmem:[%s150 + $0x38] sm:$0xff]
        %v159 = vld [vmem:[%s150 + $0x40] sm:$0xff]
        %v160 = vld [vmem:[%s150 + $0x48] sm:$0xff]
        %v161 = vld [vmem:[%s150 + $0x50] sm:$0xff]
        %v162 = vld [vmem:[%s150 + $0x58] sm:$0xff]
        %v163 = vld [vmem:[%s150 + $0x60] sm:$0xff]
        %v164 = vld [vmem:[%s150 + $0x68] sm:$0xff]
        %v165 = vld [vmem:[%s150 + $0x70] sm:$0xff]
        %v166 = vld [vmem:[%s150 + $0x78] sm:$0xff]
        %v167 = vld [vmem:[%s150 + $0x80] sm:$0xff]
        %v168 = vld [vmem:[%s150 + $0x88] sm:$0xff]
        %v169 = vld [vmem:[%s150 + $0x90] sm:$0xff]
        %v170 = vld [vmem:[%s150 + $0x98] sm:$0xff]
        %v171 = vld [vmem:[%s150 + $0xa0] sm:$0xff]
        %v172 = vld [vmem:[%s150 + $0xa8] sm:$0xff]
        %v173 = vld [vmem:[%s150 + $0xb0] sm:$0xff]
        %v174 = vld [vmem:[%s150 + $0xb8] sm:$0xff]
        %v175 = vld [vmem:[%s150 + $0xc0] sm:$0xff]
        %v176 = vld [vmem:[%s150 + $0xc8] sm:$0xff]
        %v177 = vld [vmem:[%s150 + $0xd0] sm:$0xff]
        %v178 = vld [vmem:[%s150 + $0xd8] sm:$0xff]
        %v179 = vld [vmem:[%s150 + $0xe0] sm:$0xff]
        %v180 = vld [vmem:[%s150 + $0xe8] sm:$0xff]
        %v181 = vld [vmem:[%s150 + $0xf0] sm:$0xff]
        %v182 = vld [vmem:[%s150 + $0xf8] sm:$0xff]
        %vm183 = vcmask 31744
        %v184 = vsel %vm183, %v151, 0.0
        %v185 = vsel %vm183, %v152, 0.0
        %v186 = vadd.f32 %v184, %v185
        %v187 = vsel %vm183, %v153, 0.0
        %v188 = vadd.f32 %v186, %v187
        %v189 = vsel %vm183, %v154, 0.0
        %v190 = vadd.f32 %v188, %v189
        %v191 = vsel %vm183, %v155, 0.0
        %v192 = vadd.f32 %v190, %v191
        %v193 = vsel %vm183, %v156, 0.0
        %v194 = vadd.f32 %v192, %v193
        %v195 = vsel %vm183, %v157, 0.0
        %v196 = vadd.f32 %v194, %v195
        %v197 = vsel %vm183, %v158, 0.0
        %v198 = vadd.f32 %v196, %v197
        %v199 = vsel %vm183, %v159, 0.0
        %v200 = vadd.f32 %v198, %v199
        %v201 = vsel %vm183, %v160, 0.0
        %v202 = vadd.f32 %v200, %v201
        %v203 = vsel %vm183, %v161, 0.0
        %v204 = vadd.f32 %v202, %v203
        %v205 = vsel %vm183, %v162, 0.0
        %v206 = vadd.f32 %v204, %v205
        %v207 = vsel %vm183, %v163, 0.0
        %v208 = vadd.f32 %v206, %v207
        %v209 = vsel %vm183, %v164, 0.0
        %v210 = vadd.f32 %v208, %v209
        %v211 = vsel %vm183, %v165, 0.0
        %v212 = vadd.f32 %v210, %v211
        %v213 = vsel %vm183, %v166, 0.0
        %v214 = vadd.f32 %v212, %v213
        %v215 = vsel %vm183, %v167, 0.0
        %v216 = vadd.f32 %v214, %v215
        %v217 = vsel %vm183, %v168, 0.0
        %v218 = vadd.f32 %v216, %v217
        %v219 = vsel %vm183, %v169, 0.0
        %v220 = vadd.f32 %v218, %v219
        %v221 = vsel %vm183, %v170, 0.0
        %v222 = vadd.f32 %v220, %v221
        %v223 = vsel %vm183, %v171, 0.0
        %v224 = vadd.f32 %v222, %v223
        %v225 = vsel %vm183, %v172, 0.0
        %v226 = vadd.f32 %v224, %v225
        %v227 = vsel %vm183, %v173, 0.0
        %v228 = vadd.f32 %v226, %v227
        %v229 = vsel %vm183, %v174, 0.0
        %v230 = vadd.f32 %v228, %v229
        %v231 = vsel %vm183, %v175, 0.0
        %v232 = vadd.f32 %v230, %v231
        %v233 = vsel %vm183, %v176, 0.0
        %v234 = vadd.f32 %v232, %v233
        %v235 = vsel %vm183, %v177, 0.0
        %v236 = vadd.f32 %v234, %v235
        %v237 = vsel %vm183, %v178, 0.0
        %v238 = vadd.f32 %v236, %v237
        %v239 = vsel %vm183, %v179, 0.0
        %v240 = vadd.f32 %v238, %v239
        %v241 = vsel %vm183, %v180, 0.0
        %v242 = vadd.f32 %v240, %v241
        %v243 = vsel %vm183, %v181, 0.0
        %v244 = vadd.f32 %v242, %v243
        %v245 = vsel %vm183, %v182, 0.0
        %v246 = vadd.f32 %v244, %v245
        %v247 = vrot.slane %v246, 4
        %v248 = vadd.f32 %v246, %v247
        %v249 = vrot.slane %v248, 2
        %v250 = vadd.f32 %v248, %v249
        %v251 = vrot.slane %v250, 1
        %v252 = vadd.f32 %v250, %v251
        %v253 = vmul.f32 %v252, 0.00390625
        %v254 = vsub.f32 %v151, %v253
        %v255 = vsub.f32 %v152, %v253
        %v256 = vsub.f32 %v153, %v253
        %v257 = vsub.f32 %v154, %v253
        %v258 = vsub.f32 %v155, %v253
        %v259 = vsub.f32 %v156, %v253
        %v260 = vsub.f32 %v157, %v253
        %v261 = vsub.f32 %v158, %v253
        %v262 = vsub.f32 %v159, %v253
        %v263 = vsub.f32 %v160, %v253
        %v264 = vsub.f32 %v161, %v253
        %v265 = vsub.f32 %v162, %v253
        %v266 = vsub.f32 %v163, %v253
        %v267 = vsub.f32 %v164, %v253
        %v268 = vsub.f32 %v165, %v253
        %v269 = vsub.f32 %v166, %v253
        %v270 = vsub.f32 %v167, %v253
        %v271 = vsub.f32 %v168, %v253
        %v272 = vsub.f32 %v169, %v253
        %v273 = vsub.f32 %v170, %v253
        %v274 = vsub.f32 %v171, %v253
        %v275 = vsub.f32 %v172, %v253
        %v276 = vsub.f32 %v173, %v253
        %v277 = vsub.f32 %v174, %v253
        %v278 = vsub.f32 %v175, %v253
        %v279 = vsub.f32 %v176, %v253
        %v280 = vsub.f32 %v177, %v253
        %v281 = vsub.f32 %v178, %v253
        %v282 = vsub.f32 %v179, %v253
        %v283 = vsub.f32 %v180, %v253
        %v284 = vsub.f32 %v181, %v253
        %v285 = vsub.f32 %v182, %v253
        %vm286 = vcmask 24576
        %287 = vst.msk [vmem:[%s139] sm:$0x1] %vm286, %v252
        %v288 = vmul.f32 %v254, %v254
        %v289 = vmul.f32 %v255, %v255
        %v290 = vmul.f32 %v256, %v256
        %v291 = vmul.f32 %v257, %v257
        %v292 = vmul.f32 %v258, %v258
        %v293 = vmul.f32 %v259, %v259
        %v294 = vmul.f32 %v260, %v260
        %v295 = vmul.f32 %v261, %v261
        %v296 = vmul.f32 %v262, %v262
        %v297 = vmul.f32 %v263, %v263
        %v298 = vmul.f32 %v264, %v264
        %v299 = vmul.f32 %v265, %v265
        %v300 = vmul.f32 %v266, %v266
        %v301 = vmul.f32 %v267, %v267
        %v302 = vmul.f32 %v268, %v268
        %v303 = vmul.f32 %v269, %v269
        %v304 = vmul.f32 %v270, %v270
        %v305 = vmul.f32 %v271, %v271
        %v306 = vmul.f32 %v272, %v272
        %v307 = vmul.f32 %v273, %v273
        %v308 = vmul.f32 %v274, %v274
        %v309 = vmul.f32 %v275, %v275
        %v310 = vmul.f32 %v276, %v276
        %v311 = vmul.f32 %v277, %v277
        %v312 = vmul.f32 %v278, %v278
        %v313 = vmul.f32 %v279, %v279
        %v314 = vmul.f32 %v280, %v280
        %v315 = vmul.f32 %v281, %v281
        %v316 = vmul.f32 %v282, %v282
        %v317 = vmul.f32 %v283, %v283
        %v318 = vmul.f32 %v284, %v284
        %v319 = vmul.f32 %v285, %v285
        %v320 = vsel %vm183, %v288, 0.0
        %v321 = vsel %vm183, %v289, 0.0
        %v322 = vadd.f32 %v320, %v321
        %v323 = vsel %vm183, %v290, 0.0
        %v324 = vadd.f32 %v322, %v323
        %v325 = vsel %vm183, %v291, 0.0
        %v326 = vadd.f32 %v324, %v325
        %v327 = vsel %vm183, %v292, 0.0
        %v328 = vadd.f32 %v326, %v327
        %v329 = vsel %vm183, %v293, 0.0
        %v330 = vadd.f32 %v328, %v329
        %v331 = vsel %vm183, %v294, 0.0
        %v332 = vadd.f32 %v330, %v331
        %v333 = vsel %vm183, %v295, 0.0
        %v334 = vadd.f32 %v332, %v333
        %v335 = vsel %vm183, %v296, 0.0
        %v336 = vadd.f32 %v334, %v335
        %v337 = vsel %vm183, %v297, 0.0
        %v338 = vadd.f32 %v336, %v337
        %v339 = vsel %vm183, %v298, 0.0
        %v340 = vadd.f32 %v338, %v339
        %v341 = vsel %vm183, %v299, 0.0
        %v342 = vadd.f32 %v340, %v341
        %v343 = vsel %vm183, %v300, 0.0
        %v344 = vadd.f32 %v342, %v343
        %v345 = vsel %vm183, %v301, 0.0
        %v346 = vadd.f32 %v344, %v345
        %v347 = vsel %vm183, %v302, 0.0
        %v348 = vadd.f32 %v346, %v347
        %v349 = vsel %vm183, %v303, 0.0
        %v350 = vadd.f32 %v348, %v349
        %v351 = vsel %vm183, %v304, 0.0
        %v352 = vadd.f32 %v350, %v351
        %v353 = vsel %vm183, %v305, 0.0
        %v354 = vadd.f32 %v352, %v353
        %v355 = vsel %vm183, %v306, 0.0
        %v356 = vadd.f32 %v354, %v355
        %v357 = vsel %vm183, %v307, 0.0
        %v358 = vadd.f32 %v356, %v357
        %v359 = vsel %vm183, %v308, 0.0
        %v360 = vadd.f32 %v358, %v359
        %v361 = vsel %vm183, %v309, 0.0
        %v362 = vadd.f32 %v360, %v361
        %v363 = vsel %vm183, %v310, 0.0
        %v364 = vadd.f32 %v362, %v363
        %v365 = vsel %vm183, %v311, 0.0
        %v366 = vadd.f32 %v364, %v365
        %v367 = vsel %vm183, %v312, 0.0
        %v368 = vadd.f32 %v366, %v367
        %v369 = vsel %vm183, %v313, 0.0
        %v370 = vadd.f32 %v368, %v369
        %v371 = vsel %vm183, %v314, 0.0
        %v372 = vadd.f32 %v370, %v371
        %v373 = vsel %vm183, %v315, 0.0
        %v374 = vadd.f32 %v372, %v373
        %v375 = vsel %vm183, %v316, 0.0
        %v376 = vadd.f32 %v374, %v375
        %v377 = vsel %vm183, %v317, 0.0
        %v378 = vadd.f32 %v376, %v377
        %v379 = vsel %vm183, %v318, 0.0
        %v380 = vadd.f32 %v378, %v379
        %v381 = vsel %vm183, %v319, 0.0
        %v382 = vadd.f32 %v380, %v381
        %v383 = vrot.slane %v382, 4
        %v384 = vadd.f32 %v382, %v383
        %v385 = vrot.slane %v384, 2
        %v386 = vadd.f32 %v384, %v385
        %v387 = vrot.slane %v386, 1
        %v388 = vadd.f32 %v386, %v387
        %389 = vst.msk [vmem:[%s145] sm:$0x1] %vm286, %v388
        %s390 = sand.u32 %s54, 1
        %s391 = scalar_lea.sflag [#allocation3], %s390
        %s392 = sand.u32 %s54, 1
        %s393 = scalar_lea.vmem [#allocation2], %s392
        %s394 = sand.u32 %s80, 1
        %s395 = scalar_lea.sflag [#allocation5], %s394
        %s396 = sand.u32 %s80, 1
        %s397 = scalar_lea.vmem [#allocation4], %s396
        // Predicated region
        $region25: #{tpu_custom_call.1} parent=23 // pred_check
          %p398 = pneg %p64
        $region26: #{tpu_custom_call.1} parent=23 // pred_check_branch
          %400 = sbr.rel (%p398) target = $region28
        $region27: #{tpu_custom_call.1} parent=23 // pred_region
          %s402 = ssub.s32 16, 16
          %403 = vsyncadd %s391, %s402
          %s404 = smul.addr %s20, 16
          %s405 = scalar_lea.hbm %s1, %s404
          %s407 = sshll.u32 %s393, 4
          %s408 = int_to_ptr.vmem [resolvable:$true] %s407
          %410 = dma.vmem_to_hbm [thread:$0]  %s408, 16, %s405, %s391
        $region28: #{tpu_custom_call.1} parent=23 // pred_fallthru
          _
        // Predicated region
        $region29: #{tpu_custom_call.1} parent=23 // pred_check
          %p411 = pneg %p90
        $region30: #{tpu_custom_call.1} parent=23 // pred_check_branch
          %413 = sbr.rel (%p411) target = $region32
        $region31: #{tpu_custom_call.1} parent=23 // pred_region
          %s415 = ssub.s32 16, 16
          %416 = vsyncadd %s395, %s415
          %s417 = smul.addr %s20, 16
          %s418 = scalar_lea.hbm %s2, %s417
          %s420 = sshll.u32 %s397, 4
          %s421 = int_to_ptr.vmem [resolvable:$true] %s420
          %423 = dma.vmem_to_hbm [thread:$0]  %s421, 16, %s418, %s395
        $region32: #{tpu_custom_call.1} parent=23 // pred_fallthru
          _
      $region24: #{tpu_custom_call.1} parent=5 // pred_fallthru
        _
      %p424 = scmp.le.s32.totalorder 2, %s15
      // Predicated region
      $region33: #{tpu_custom_call.1} parent=5 // pred_check
        %p425 = pneg %p424
      $region34: #{tpu_custom_call.1} parent=5 // pred_check_branch
        %427 = sbr.rel (%p425) target = $region36
      $region35: #{tpu_custom_call.1} parent=5 // pred_region
        %s428 = ssub.s32 %s15, 2
        // Predicated region
        $region37: #{tpu_custom_call.1} parent=35 // pred_check
          %p429 = pneg %p70
        $region38: #{tpu_custom_call.1} parent=35 // pred_check_branch
          %431 = sbr.rel (%p429) target = $region40
        $region39: #{tpu_custom_call.1} parent=35 // pred_region
          %s432 = sand.u32 %s55, 1
          %s433 = scalar_lea.sflag [#allocation3], %s432
          %s434 = sand.u32 %s55, 1
          %s435 = scalar_lea.vmem [#allocation2], %s434
          %436 = dma.done %s433, 16
        $region40: #{tpu_custom_call.1} parent=35 // pred_fallthru
          _
        // Predicated region
        $region41: #{tpu_custom_call.1} parent=35 // pred_check
          %p437 = pneg %p96
        $region42: #{tpu_custom_call.1} parent=35 // pred_check_branch
          %439 = sbr.rel (%p437) target = $region44
        $region43: #{tpu_custom_call.1} parent=35 // pred_region
          %s440 = sand.u32 %s81, 1
          %s441 = scalar_lea.sflag [#allocation5], %s440
          %s442 = sand.u32 %s81, 1
          %s443 = scalar_lea.vmem [#allocation4], %s442
          %444 = dma.done %s441, 16
        $region44: #{tpu_custom_call.1} parent=35 // pred_fallthru
          _
      $region36: #{tpu_custom_call.1} parent=5 // pred_fallthru
        _
    $region6: #{tpu_custom_call.1} parent=1 // loop_footer
      %s19 = sadd.s32 1, %s15
    $region7: #{tpu_custom_call.1} parent=1 // loop_footer_branch
      %14 = sbr.rel target = $region3
    $region8: #{tpu_custom_call.1} parent=1 // loop_exit
      _
    %445 = vsyncpa [#allocation3], 1
    %s446 = scalar_lea.sflag [#allocation3], 1
    %447 = vsyncpa %s446, 1
    %448 = vsyncpa [#allocation5], 1
    %s449 = scalar_lea.sflag [#allocation5], 1
    %450 = vsyncpa %s449, 1

</llo_original>
